<compile_context>
chip_gen: v7x
topology: tpu7x:2x2x1
jax: 0.10.0
libtpu: 0.0.40
codegen_flags: <defaults>
</compile_context>

<pallas_src>
import math

import jax
import jax.numpy as jnp
from jax.experimental import pallas as pl
from jax.experimental.pallas import tpu as pltpu


def _drop_path_kernel(scale_ref, x_ref, o_ref):
    """One grid step = one (batch-tile, row-tile) block.

    scale_ref: (nb, 1, 1) f32 per-sample scale (0 or 1/keep_prob).
    x_ref / o_ref: (nb, ts, lane) VMEM tiles.
    Note: the scale is rounded to x.dtype before the multiply; for bf16 inputs
    this differs from torch's per-element bf16 divide by <= 1 ulp of the scale.
    """
    o_ref[...] = x_ref[...] * scale_ref[...].astype(x_ref.dtype)


def _choose_layout(B, M, itemsize, tile_budget_bytes=4 << 20):
    """Pick (padded M, S, lane, row tile ts, samples-per-block nb)."""
    # Lane-dense feature dim: pad to a multiple of 128 unless it is tiny.
    if M % 128 == 0 or M < 128:
        Mp = M
    else:
        Mp = ((M + 127) // 128) * 128

    if Mp % 128 == 0 and Mp > 0:
        lane = 128
        while Mp % (lane * 2) == 0 and lane * 2 <= 1024:
            lane *= 2
    else:
        lane = max(Mp, 1)          # tiny feature dims: full-extent lane (legal block)
    S = max(Mp // lane, 1)

    # Sublane packing per dtype: 8 rows for f32, 16 for bf16, 32 for int8/fp8.
    sub = max(1, (8 * 4) // itemsize)
    rows_budget = max(1, tile_budget_bytes // (lane * itemsize))
    if rows_budget >= S:
        ts = S                     # whole sample per block
        nb = max(1, min(B, tile_budget_bytes // max(1, S * lane * itemsize)))
    else:
        ts = max(sub, (rows_budget // sub) * sub)
        nb = 1
    return Mp, S, lane, ts, nb


def drop_path(x, drop_prob: float = 0.0, training: bool = False, *,
              key=None, seed: int = 0):
    """Pallas implementation of stochastic depth per sample."""
    if drop_prob == 0.0 or not training:
        return x

    keep_prob = 1.0 - float(drop_prob)
    if keep_prob <= 0.0:
        # Every sample dropped; torch's unguarded code would produce NaN here.
        return jnp.zeros_like(x)

    if key is None:
        key = jax.random.PRNGKey(seed)

    B = x.shape[0]
    # Per-sample keep decision, matching torch: floor(keep_prob + U[0,1)).
    u = jax.random.uniform(key, (B,), dtype=jnp.float32)
    keep = jnp.floor(keep_prob + u)                       # (B,) in {0., 1.}
    scale = (keep * (1.0 / keep_prob)).reshape(B, 1, 1)   # f32, 0 or 1/keep_prob

    itemsize = jnp.dtype(x.dtype).itemsize
    M = math.prod(x.shape[1:])                            # 1 for 1-D inputs
    Mp, S, lane, ts, nb = _choose_layout(B, M, itemsize)

    x2 = x.reshape(B, M)
    if Mp != M:
        x2 = jnp.pad(x2, ((0, 0), (0, Mp - M)))           # cheap XLA pad outside kernel
    x3 = x2.reshape(B, S, lane)

    grid = (pl.cdiv(B, nb), pl.cdiv(S, ts))
    block_bytes = nb * ts * lane * itemsize
    # 2 arrays (x, out) x 2 pipeline buffers x block, scale blocks, + headroom.
    vmem_limit = int(4 * block_bytes + 4 * nb * 4 + (2 << 20))

    out3 = pl.pallas_call(
        _drop_path_kernel,
        out_shape=jax.ShapeDtypeStruct((B, S, lane), x.dtype),
        grid=grid,
        in_specs=[
            pl.BlockSpec((nb, 1, 1), lambda i, j: (i, 0, 0)),       # per-sample scale
            pl.BlockSpec((nb, ts, lane), lambda i, j: (i, j, 0)),   # activation tile
        ],
        out_specs=pl.BlockSpec((nb, ts, lane), lambda i, j: (i, j, 0)),
        compiler_params=pltpu.CompilerParams(
            dimension_semantics=("parallel", "parallel"),           # no cross-step state
            vmem_limit_bytes=vmem_limit,
        ),
    )(scale, x3)

    out2 = out3.reshape(B, Mp)
    if Mp != M:
        out2 = out2[:, :M]
    return out2.reshape(x.shape)


class DropPath:
    """Mirror of the PyTorch DropPath module (no parameters)."""

    def __init__(self, drop_prob=None):
        self.drop_prob = drop_prob
        self.training = True

    def __call__(self, x, *, key=None, seed: int = 0):
        p = 0.0 if self.drop_prob is None else self.drop_prob
        return drop_path(x, p, self.training, key=key, seed=seed)


def _jax_reference(x, drop_prob, seed):
    keep_prob = 1.0 - drop_prob
    B = x.shape[0]
    u = jax.random.uniform(jax.random.PRNGKey(seed), (B,), dtype=jnp.float32)
    s = jnp.floor(keep_prob + u) / keep_prob
    return x * s.reshape((B,) + (1,) * (x.ndim - 1))


if __name__ == "__main__":
    key = jax.random.PRNGKey(0)
    drop_prob = 0.3
    keep_prob = 1.0 - drop_prob

    # Transformer-style (B, N, C) activation.
    B, N, C = 2, 8, 32
    x = jax.random.normal(key, (B, N, C), dtype=jnp.float32)
    seed = 1234
    module = DropPath(drop_prob=drop_prob)
    module.training = True
    out = jax.block_until_ready(module(x, seed=seed))
    ref = _jax_reference(x, drop_prob, seed)
    assert bool(jnp.allclose(out, ref, atol=1e-6)), "3-D mismatch vs JAX reference"
    for b in range(B):
        zeroed = bool(jnp.allclose(out[b], 0.0))
        scaled = bool(jnp.allclose(out[b], x[b] / keep_prob, atol=1e-6))
        assert zeroed or scaled, f"sample {b}: not a valid drop-path output"

    # 4-D conv-style input (feature size multiple of 128 -> lane-dense path).
    x4 = jax.random.normal(jax.random.PRNGKey(1), (2, 4, 16, 16), dtype=jnp.float32)
    out4 = jax.block_until_ready(drop_path(x4, drop_prob, True, seed=7))
    assert bool(jnp.allclose(out4, _jax_reference(x4, drop_prob, 7), atol=1e-6))

    # Feature size NOT a multiple of 128 -> padded lane-dense path (no masked vst).
    xp = jax.random.normal(jax.random.PRNGKey(2), (2, 7, 20), dtype=jnp.float32)
    outp = jax.block_until_ready(drop_path(xp, drop_prob, True, seed=3))
    assert bool(jnp.allclose(outp, _jax_reference(xp, drop_prob, 3), atol=1e-6))

    # bf16 activations (sublane packing = 16).
    xb = jax.random.normal(jax.random.PRNGKey(3), (4, 8, 128), dtype=jnp.bfloat16)
    outb = jax.block_until_ready(drop_path(xb, drop_prob, True, seed=11))
    refb = _jax_reference(xb.astype(jnp.float32), drop_prob, 11)
    assert bool(jnp.allclose(outb.astype(jnp.float32), refb, atol=2e-2, rtol=2e-2))

    # 1-D input edge case.
    x1 = jax.random.normal(jax.random.PRNGKey(4), (5,), dtype=jnp.float32)
    out1 = jax.block_until_ready(drop_path(x1, drop_prob, True, seed=21))
    assert bool(jnp.allclose(out1, _jax_reference(x1, drop_prob, 21), atol=1e-6))

    # drop_prob >= 1 -> all dropped (zeros), no NaN.
    outz = jax.block_until_ready(drop_path(x, 1.0, True, seed=5))
    assert bool(jnp.array_equal(outz, jnp.zeros_like(x)))

    # Eval mode / drop_prob=0 -> identity path.
    module.training = False
    out_eval = jax.block_until_ready(module(x))
    assert bool(jnp.array_equal(out_eval, x))

    print("KERNEL_OK")
</pallas_src>

<mosaic_0001>
module attributes {stable_mosaic.version = 11 : i64} {
  func.func @_drop_path_kernel(%arg0: i32, %arg1: i32, %arg2: memref<2x1x1xf32, #tpu.memory_space<vmem>>, %arg3: memref<2x1x256xf32, #tpu.memory_space<vmem>>, %arg4: memref<2x1x256xf32, #tpu.memory_space<vmem>>) attributes {dimension_semantics = [#tpu.dimension_semantics<parallel>, #tpu.dimension_semantics<parallel>], iteration_bounds = array<i64: 1, 1>, scalar_prefetch = 0 : i64, scratch_operands = 0 : i64, tpu.core_type = #tpu.core_type<tc>, window_params = [{transform_indices = @transform_0, window_bounds = array<i64: 2, 1, 1>}, {transform_indices = @transform_1, window_bounds = array<i64: 2, 1, 256>}, {transform_indices = @transform_2, window_bounds = array<i64: 2, 1, 256>}]} {
    %c0 = arith.constant 0 : index
    %c0_0 = arith.constant 0 : index
    %c0_1 = arith.constant 0 : index
    %0 = vector.load %arg3[%c0, %c0_0, %c0_1] : memref<2x1x256xf32, #tpu.memory_space<vmem>>, vector<2x1x256xf32>
    %c0_2 = arith.constant 0 : index
    %c0_3 = arith.constant 0 : index
    %c0_4 = arith.constant 0 : index
    %1 = vector.load %arg2[%c0_2, %c0_3, %c0_4] : memref<2x1x1xf32, #tpu.memory_space<vmem>>, vector<2x1x1xf32>
    %2 = vector.broadcast %1 : vector<2x1x1xf32> to vector<2x1x256xf32>
    %3 = arith.mulf %0, %2 : vector<2x1x256xf32>
    %c0_5 = arith.constant 0 : index
    %c0_6 = arith.constant 0 : index
    %c0_7 = arith.constant 0 : index
    %4 = vector.load %arg4[%c0_5, %c0_6, %c0_7] : memref<2x1x256xf32, #tpu.memory_space<vmem>>, vector<2x1x256xf32>
    tpu.vector_store %arg4[%c0_5, %c0_6, %c0_7], %3 {strides = array<i32>} : memref<2x1x256xf32, #tpu.memory_space<vmem>>, vector<2x1x256xf32>,
    return
  }
  func.func @transform_0(%arg0: i32, %arg1: i32) -> (i32, i32, i32) {
    %c0_i32 = arith.constant 0 : i32
    %c0_i32_0 = arith.constant 0 : i32
    %c0_i32_1 = arith.constant 0 : i32
    return %arg0, %c0_i32, %c0_i32_0 : i32, i32, i32
  }
  func.func @transform_1(%arg0: i32, %arg1: i32) -> (i32, i32, i32) {
    %c0_i32 = arith.constant 0 : i32
    %c0_i32_0 = arith.constant 0 : i32
    return %arg0, %arg1, %c0_i32 : i32, i32, i32
  }
  func.func @transform_2(%arg0: i32, %arg1: i32) -> (i32, i32, i32) {
    %c0_i32 = arith.constant 0 : i32
    %c0_i32_0 = arith.constant 0 : i32
    return %arg0, %arg1, %c0_i32 : i32, i32, i32
  }
}

</mosaic_0001>

<llo_original>
// kernel: tpu_custom_call.1
$region0: #{tpu_custom_call.1}
  #allocation0 [shape = 'u32[]', space=smem, size = 0x4, offset = 0x4, fixed_abs, tag = 'smem constant byte address 0x4 - core index']
  #allocation1 [shape = 'u32[144,128]{1,0:T(1,128)}', space=vmem, size = 0x12000, scoped, tag = 'internal scratch']
  %s0 = inlined_call_operand.vmem [shape: f32[2,1,1], index: 0, kind: input, shape index: {}]
  %s1 = inlined_call_operand.vmem [shape: f32[2,1,256], index: 1, kind: input, shape index: {}]
  %s2 = inlined_call_operand.hbm [shape: f32[2,1,256], index: 2, kind: output, shape index: {}]
  %s3 = sld [smem:[#allocation0]]
  $region18: #{tpu_custom_call.1} parent=0
    _
  %s5 = ssub.s32 1, %s3
  %s6 = scalar_select 0, %s5, %s3
  $region1: #{tpu_custom_call.1} parent=0
    #allocation2 [shape = 'u8[2048]{0}', space=vmem, size = 0x800, scoped, tag = 'output window, operand 0, single buffered']
    #allocation3 [shape = 's32[1]{0}', space=sflag, size = 0x4, scoped, tag = 'scoped memory for tpu_custom_call.1']
    %7 = vsyncpa [#allocation3], 0
    // Predicated region
    $region2: #{tpu_custom_call.1} parent=1 // pred_check
      _
    $region3: #{tpu_custom_call.1} parent=1 // pred_check_branch
      %9 = sbr.rel (0) target = $region5
    $region4: #{tpu_custom_call.1} parent=1 // pred_region
      _
    $region5: #{tpu_custom_call.1} parent=1 // pred_fallthru
      _
    // Predicated region
    $region6: #{tpu_custom_call.1} parent=1 // pred_check
      _
    $region7: #{tpu_custom_call.1} parent=1 // pred_check_branch
      %11 = sbr.rel (0) target = $region9
    $region8: #{tpu_custom_call.1} parent=1 // pred_region
      _
    $region9: #{tpu_custom_call.1} parent=1 // pred_fallthru
      _
    %v12 = vld [vmem:[%s1] sm:$0x3]
    %v13 = vld [vmem:[%s1 + $0x2] sm:$0x3]
    %v14 = vld [vmem:[%s0] sm:$0x1]
    %v15 = vld [vmem:[%s0 + $0x1] sm:$0x1]
    %17 = vset.pattern.permute.xlu0 0
    %18 = vperm.xlu0 %17, %v14
    %v19 = vpop.permute.xlu0 %18
    %v21 = vlaneseq
    %v22 = vshrl.u32 %v21, 7
    %v23 = vsub.s32 0, %v22
    %v24 = vrot.slane %v19, %v23
    %26 = vset.pattern.permute.xlu0 0
    %27 = vperm.xlu0 %26, %v15
    %v28 = vpop.permute.xlu0 %27
    %v30 = vlaneseq
    %v31 = vshrl.u32 %v30, 7
    %v32 = vsub.s32 0, %v31
    %v33 = vrot.slane %v28, %v32
    %v34 = vmul.f32 %v12, %v24
    %v35 = vmul.f32 %v13, %v33
    %v36 = vlaneseq
    %vm37 = vcmp.ge.s32.totalorder %v36, 0
    %vm38 = vcmp.lt.s32.totalorder %v36, 256
    %vm39 = vmand %vm37, %vm38
    %40 = vst.msk [vmem:[#allocation2] sm:$0x3] %vm39, %v34
    %41 = vst.msk [vmem:[#allocation2 + $0x2] sm:$0x3] %vm39, %v35
    // Predicated region
    $region10: #{tpu_custom_call.1} parent=1 // pred_check
      _
    $region11: #{tpu_custom_call.1} parent=1 // pred_check_branch
      %43 = sbr.rel (0) target = $region13
    $region12: #{tpu_custom_call.1} parent=1 // pred_region
      %s45 = ssub.s32 64, 64
      %46 = vsyncadd [#allocation3], %s45
      %s47 = sshll.u32 [#allocation2], 4
      %s48 = int_to_ptr.vmem [resolvable:$true] %s47
      %53 = dma.vmem_to_hbm [thread:$0]  %s48, 64, %s2, [#allocation3], 32, 32, 2
    $region13: #{tpu_custom_call.1} parent=1 // pred_fallthru
      _
    // Predicated region
    $region14: #{tpu_custom_call.1} parent=1 // pred_check
      _
    $region15: #{tpu_custom_call.1} parent=1 // pred_check_branch
      %55 = sbr.rel (0) target = $region17
    $region16: #{tpu_custom_call.1} parent=1 // pred_region
      %56 = dma.done [#allocation3], 64
    $region17: #{tpu_custom_call.1} parent=1 // pred_fallthru
      _
    %57 = vsyncpa [#allocation3], 1

</llo_original>
